<compile_context>
chip_gen: v7x
topology: tpu7x:2x2x1
jax: 0.10.0
libtpu: 0.0.40
codegen_flags: <defaults>
</compile_context>

<pallas_src>
import jax
import jax.numpy as jnp
from jax import lax
from jax.experimental import pallas as pl
from jax.experimental.pallas import tpu as pltpu


def _linear_kernel(x_ref, w_ref, b_ref, o_ref):
    # x_ref: (tb, D)   w_ref: (C, D)   b_ref: (1, C)   o_ref: (tb, C)
    # Contract on D (dim 1 of both operands); RHS stays in native (C, D)
    # layout — the MXU handles the "transpose" internally.
    acc = lax.dot_general(
        x_ref[...], w_ref[...],
        dimension_numbers=(((1,), (1,)), ((), ())),
        preferred_element_type=jnp.float32,
    )
    o_ref[...] = (acc + b_ref[...]).astype(o_ref.dtype)


def _pick_batch_tile(B: int) -> int:
    """Batch tile: full block for tiny B, >=2 blocks for mid B (megacore),
    256-row blocks for large B (HBM roofline, bounded VMEM)."""
    if B <= 64:
        return B                      # block == full dim is always legal
    if B <= 512:
        half = pl.cdiv(B, 2)          # at least 2 grid blocks
        return pl.cdiv(half, 8) * 8   # sublane-aligned
    return 256


def simple_classifier_head(x, weight, bias):
    """Pallas equivalent of SimpleClassifierHead.forward.

    x:      (B, D) float32
    weight: (C, D) float32  (native PyTorch nn.Linear layout — NOT transposed)
    bias:   (C,)   float32
    returns (B, C) float32
    """
    B, D = x.shape
    C = weight.shape[0]
    b2 = bias.reshape(1, C)  # 2D for TPU vreg layout

    tb = _pick_batch_tile(B)
    grid = (pl.cdiv(B, tb),)

    cost = pl.CostEstimate(
        flops=2 * B * D * C,
        transcendentals=0,
        bytes_accessed=4 * (B * D + C * D + C + B * C),
    )

    return pl.pallas_call(
        _linear_kernel,
        out_shape=jax.ShapeDtypeStruct((B, C), x.dtype),
        grid_spec=pltpu.PrefetchScalarGridSpec(
            num_scalar_prefetch=0,
            grid=grid,
            in_specs=[
                pl.BlockSpec((tb, D), lambda i: (i, 0)),   # batch tile of x
                pl.BlockSpec((C, D), lambda i: (0, 0)),    # whole weight, resident
                pl.BlockSpec((1, C), lambda i: (0, 0)),    # bias row
            ],
            out_specs=pl.BlockSpec((tb, C), lambda i: (i, 0)),
        ),
        compiler_params=pltpu.CompilerParams(
            dimension_semantics=("parallel",),
        ),
        cost_estimate=cost,
    )(x, weight, b2)


if __name__ == "__main__":
    # Module defaults: input_dim = 768 (DINO features); small batch / classes.
    D, C = 768, 16

    key = jax.random.PRNGKey(0)
    kx, kw, kb, kx2 = jax.random.split(key, 4)

    # nn.Linear-shaped params: weight (C, D), bias (C,)
    bound = 1.0 / (D ** 0.5)
    weight = jax.random.uniform(kw, (C, D), jnp.float32, -bound, bound)
    bias = jax.random.uniform(kb, (C,), jnp.float32, -bound, bound)

    # Small default batch (single block path).
    B = 8
    x = jax.random.normal(kx, (B, D), jnp.float32)
    out = jax.block_until_ready(simple_classifier_head(x, weight, bias))
    ref = x @ weight.T + bias
    assert out.shape == (B, C)
    assert jnp.allclose(out, ref, atol=1e-4, rtol=1e-4)

    # Mid batch exercising the multi-block grid + partial (masked) tail block.
    B2 = 72
    x2 = jax.random.normal(kx2, (B2, D), jnp.float32)
    out2 = jax.block_until_ready(simple_classifier_head(x2, weight, bias))
    ref2 = x2 @ weight.T + bias
    assert out2.shape == (B2, C)
    assert jnp.allclose(out2, ref2, atol=1e-4, rtol=1e-4)

    print("KERNEL_OK")
</pallas_src>

<mosaic_0001>
module attributes {stable_mosaic.version = 11 : i64} {
  func.func @_linear_kernel(%arg0: i32, %arg1: memref<8x768xf32, #tpu.memory_space<vmem>>, %arg2: memref<16x768xf32, #tpu.memory_space<vmem>>, %arg3: memref<1x16xf32, #tpu.memory_space<vmem>>, %arg4: memref<8x16xf32, #tpu.memory_space<vmem>>) attributes {dimension_semantics = [#tpu.dimension_semantics<parallel>], iteration_bounds = array<i64: 1>, scalar_prefetch = 0 : i64, scratch_operands = 0 : i64, tpu.core_type = #tpu.core_type<tc>, window_params = [{transform_indices = @transform_0, window_bounds = array<i64: 8, 768>}, {pipeline_mode = #tpu.pipeline_mode<synchronous>, transform_indices = @transform_1, window_bounds = array<i64: 16, 768>}, {pipeline_mode = #tpu.pipeline_mode<synchronous>, transform_indices = @transform_2, window_bounds = array<i64: 1, 16>}, {transform_indices = @transform_3, window_bounds = array<i64: 8, 16>}]} {
    %c0 = arith.constant 0 : index
    %c0_0 = arith.constant 0 : index
    %0 = vector.load %arg1[%c0, %c0_0] : memref<8x768xf32, #tpu.memory_space<vmem>>, vector<8x768xf32>
    %c0_1 = arith.constant 0 : index
    %c0_2 = arith.constant 0 : index
    %1 = vector.load %arg2[%c0_1, %c0_2] : memref<16x768xf32, #tpu.memory_space<vmem>>, vector<16x768xf32>
    %cst = arith.constant dense<0.000000e+00> : vector<8x16xf32>
    %2 = tpu.matmul %0, %1, %cst {dimension_numbers = #tpu.dot_dimension_numbers<[1], [1], [0], [0], [0, 0, 1, 0], [], []>} : vector<8x768xf32>, vector<16x768xf32>, vector<8x16xf32> -> vector<8x16xf32>
    %c0_3 = arith.constant 0 : index
    %c0_4 = arith.constant 0 : index
    %3 = vector.load %arg3[%c0_3, %c0_4] : memref<1x16xf32, #tpu.memory_space<vmem>>, vector<1x16xf32>
    %4 = vector.broadcast %3 : vector<1x16xf32> to vector<8x16xf32>
    %5 = arith.addf %2, %4 : vector<8x16xf32>
    %c0_5 = arith.constant 0 : index
    %c0_6 = arith.constant 0 : index
    %6 = vector.load %arg4[%c0_5, %c0_6] : memref<8x16xf32, #tpu.memory_space<vmem>>, vector<8x16xf32>
    tpu.vector_store %arg4[%c0_5, %c0_6], %5 {strides = array<i32>} : memref<8x16xf32, #tpu.memory_space<vmem>>, vector<8x16xf32>,
    return
  }
  func.func @transform_0(%arg0: i32) -> (i32, i32) {
    %c0_i32 = arith.constant 0 : i32
    %c0_i32_0 = arith.constant 0 : i32
    return %arg0, %c0_i32 : i32, i32
  }
  func.func @transform_1(%arg0: i32) -> (i32, i32) {
    %c0_i32 = arith.constant 0 : i32
    %c0_i32_0 = arith.constant 0 : i32
    %c0_i32_1 = arith.constant 0 : i32
    return %c0_i32, %c0_i32_0 : i32, i32
  }
  func.func @transform_2(%arg0: i32) -> (i32, i32) {
    %c0_i32 = arith.constant 0 : i32
    %c0_i32_0 = arith.constant 0 : i32
    %c0_i32_1 = arith.constant 0 : i32
    return %c0_i32, %c0_i32_0 : i32, i32
  }
  func.func @transform_3(%arg0: i32) -> (i32, i32) {
    %c0_i32 = arith.constant 0 : i32
    %c0_i32_0 = arith.constant 0 : i32
    return %arg0, %c0_i32 : i32, i32
  }
}

</mosaic_0001>

<llo_original>
// kernel: tpu_custom_call.1
$region0: #{tpu_custom_call.1}
  #allocation0 [shape = 'u32[]', space=smem, size = 0x4, offset = 0x4, fixed_abs, tag = 'smem constant byte address 0x4 - core index']
  #allocation1 [shape = 'u32[144,128]{1,0:T(1,128)}', space=vmem, size = 0x12000, scoped, tag = 'internal scratch']
  %s0 = inlined_call_operand.hbm [shape: f32[8,768], index: 0, kind: input, shape index: {}]
  %s1 = inlined_call_operand.hbm [shape: f32[16,768], index: 1, kind: input, shape index: {}]
  %s2 = inlined_call_operand.vmem [shape: f32[1,16], index: 2, kind: input, shape index: {}]
  %s3 = inlined_call_operand.hbm [shape: f32[8,16], index: 3, kind: output, shape index: {}]
  %s4 = sld [smem:[#allocation0]]
  $region30: #{tpu_custom_call.1} parent=0
    _
  %s6 = ssub.s32 1, %s4
  %s7 = scalar_select 0, %s6, %s4
  $region1: #{tpu_custom_call.1} parent=0
    #allocation2 [shape = 'u8[24576]{0}', space=vmem, size = 0x6000, scoped, tag = 'input window, operand 0, single buffered']
    #allocation3 [shape = 's32[1]{0}', space=sflag, size = 0x4, scoped, tag = 'scoped memory for tpu_custom_call.1']
    #allocation4 [shape = 's32[1]{0}', space=sflag, size = 0x4, scoped, tag = 'scoped memory for tpu_custom_call.1']
    #allocation5 [shape = 'u8[49152]{0}', space=vmem, size = 0xc000, scoped, tag = 'input window, operand 1, single buffered']
    #allocation6 [shape = 's32[1]{0}', space=sflag, size = 0x4, scoped, tag = 'scoped memory for tpu_custom_call.1']
    #allocation7 [shape = 'u8[4096]{0}', space=vmem, size = 0x1000, scoped, tag = 'output window, operand 0, single buffered']
    %8 = vsyncpa [#allocation3], 0
    %9 = vsyncpa [#allocation6], 0
    %10 = vsyncpa [#allocation4], 0
    // Predicated region
    $region2: #{tpu_custom_call.1} parent=1 // pred_check
      _
    $region3: #{tpu_custom_call.1} parent=1 // pred_check_branch
      %12 = sbr.rel (0) target = $region5
    $region4: #{tpu_custom_call.1} parent=1 // pred_region
      %s14 = ssub.s32 768, 768
      %15 = vsyncadd [#allocation3], %s14
      %s17 = sshll.u32 [#allocation2], 4
      %s18 = int_to_ptr.vmem [resolvable:$true] %s17
      %20 = dma.hbm_to_vmem [thread:$0]  %s0, 768, %s18, [#allocation3]
    $region5: #{tpu_custom_call.1} parent=1 // pred_fallthru
      _
    // Predicated region
    $region6: #{tpu_custom_call.1} parent=1 // pred_check
      _
    $region7: #{tpu_custom_call.1} parent=1 // pred_check_branch
      %22 = sbr.rel (0) target = $region9
    $region8: #{tpu_custom_call.1} parent=1 // pred_region
      %s24 = ssub.s32 1536, 1536
      %25 = vsyncadd [#allocation6], %s24
      %s26 = sshll.u32 [#allocation5], 4
      %s27 = int_to_ptr.vmem [resolvable:$true] %s26
      %32 = dma.hbm_to_vmem [thread:$0]  %s1, 1536, %s27, [#allocation6], 768, 768, 48
    $region9: #{tpu_custom_call.1} parent=1 // pred_fallthru
      _
    // Predicated region
    $region10: #{tpu_custom_call.1} parent=1 // pred_check
      _
    $region11: #{tpu_custom_call.1} parent=1 // pred_check_branch
      %34 = sbr.rel (0) target = $region13
    $region12: #{tpu_custom_call.1} parent=1 // pred_region
      _
    $region13: #{tpu_custom_call.1} parent=1 // pred_fallthru
      _
    // Predicated region
    $region14: #{tpu_custom_call.1} parent=1 // pred_check
      _
    $region15: #{tpu_custom_call.1} parent=1 // pred_check_branch
      %36 = sbr.rel (0) target = $region17
    $region16: #{tpu_custom_call.1} parent=1 // pred_region
      %37 = dma.done [#allocation3], 768
    $region17: #{tpu_custom_call.1} parent=1 // pred_fallthru
      _
    // Predicated region
    $region18: #{tpu_custom_call.1} parent=1 // pred_check
      _
    $region19: #{tpu_custom_call.1} parent=1 // pred_check_branch
      %39 = sbr.rel (0) target = $region21
    $region20: #{tpu_custom_call.1} parent=1 // pred_region
      %40 = dma.done [#allocation6], 1536
    $region21: #{tpu_custom_call.1} parent=1 // pred_fallthru
      _
    %v41 = vld [vmem:[#allocation2] sm:$0xff]
    %v42 = vld [vmem:[#allocation2 + $0x8] sm:$0xff]
    %v43 = vld [vmem:[#allocation2 + $0x10] sm:$0xff]
    %v44 = vld [vmem:[#allocation2 + $0x18] sm:$0xff]
    %v45 = vld [vmem:[#allocation2 + $0x20] sm:$0xff]
    %v46 = vld [vmem:[#allocation2 + $0x28] sm:$0xff]
    %v47 = vld [vmem:[#allocation5] sm:$0xff]
    %v48 = vld [vmem:[#allocation5 + $0x8] sm:$0xff]
    %v49 = vld [vmem:[#allocation5 + $0x10] sm:$0xff]
    %v50 = vld [vmem:[#allocation5 + $0x18] sm:$0xff]
    %v51 = vld [vmem:[#allocation5 + $0x20] sm:$0xff]
    %v52 = vld [vmem:[#allocation5 + $0x28] sm:$0xff]
    %v53 = vld [vmem:[#allocation5 + $0x30] sm:$0xff]
    %v54 = vld [vmem:[#allocation5 + $0x38] sm:$0xff]
    %v55 = vld [vmem:[#allocation5 + $0x40] sm:$0xff]
    %v56 = vld [vmem:[#allocation5 + $0x48] sm:$0xff]
    %v57 = vld [vmem:[#allocation5 + $0x50] sm:$0xff]
    %v58 = vld [vmem:[#allocation5 + $0x58] sm:$0xff]
    %v59 = vld [vmem:[%s2] sm:$0x1]
    %v61 = vlaneseq
    %v62 = vshrl.u32 %v61, 7
    %v63 = vsub.s32 0, %v62
    %v64 = vrot.slane %v59, %v63
    %66 = vmatprep.subr.mxu0 %v48
    %67 = vmatpush1.xpose.msra.mxu0 %v47
    %68 = vmatprep.subr.mxu0 %v54
    %69 = vmatpush1.xpose.msra.mxu0 %v53
    %70 = vmatprep.subr.mxu0 0.0
    %71 = vmatpush1.xpose.msra.mxu0 0.0
    %72 = vmatprep.subr.mxu0 0.0
    %73 = vmatpush1.xpose.msra.mxu0 0.0
    %74 = vmatprep.subr.mxu0 0.0
    %75 = vmatpush1.xpose.msra.mxu0 0.0
    %76 = vmatprep.subr.mxu0 0.0
    %77 = vmatpush1.xpose.msra.mxu0 0.0
    %78 = vmatprep.subr.mxu0 0.0
    %79 = vmatpush1.xpose.msra.mxu0 0.0
    %80 = vmatprep.subr.mxu0 0.0
    %81 = vmatpush1.xpose.msra.mxu0 0.0
    %82 = vmatprep.subr.mxu0 0.0
    %83 = vmatpush1.xpose.msra.mxu0 0.0
    %84 = vmatprep.subr.mxu0 0.0
    %85 = vmatpush1.xpose.msra.mxu0 0.0
    %86 = vmatprep.subr.mxu0 0.0
    %87 = vmatpush1.xpose.msra.mxu0 0.0
    %88 = vmatprep.subr.mxu0 0.0
    %89 = vmatpush1.xpose.msra.mxu0 0.0
    %90 = vmatprep.subr.mxu0 0.0
    %91 = vmatpush1.xpose.msra.mxu0 0.0
    %92 = vmatprep.subr.mxu0 0.0
    %93 = vmatpush1.xpose.msra.mxu0 0.0
    %94 = vmatprep.subr.mxu0 0.0
    %95 = vmatpush1.xpose.msra.mxu0 0.0
    %96 = vmatprep.subr.mxu0 0.0
    %97 = vmatpush1.xpose.msra.mxu0 0.0
    %98 = vmatprep.subr.mxu0 0.0
    %99 = vmatpush1.xpose.msra.mxu0 0.0
    %100 = vmatprep.subr.mxu0 0.0
    %101 = vmatpush1.xpose.msra.mxu0 0.0
    %102 = vmatprep.subr.mxu0 0.0
    %103 = vmatpush1.xpose.msra.mxu0 0.0
    %104 = vmatprep.subr.mxu0 0.0
    %105 = vmatpush1.xpose.msra.mxu0 0.0
    %106 = vmatprep.subr.mxu0 0.0
    %107 = vmatpush1.xpose.msra.mxu0 0.0
    %108 = vmatprep.subr.mxu0 0.0
    %109 = vmatpush1.xpose.msra.mxu0 0.0
    %110 = vmatprep.subr.mxu0 0.0
    %111 = vmatpush1.xpose.msra.mxu0 0.0
    %112 = vmatprep.subr.mxu0 0.0
    %113 = vmatpush1.xpose.msra.mxu0 0.0
    %114 = vmatprep.subr.mxu0 0.0
    %115 = vmatpush1.xpose.msra.mxu0 0.0
    %116 = vmatprep.subr.mxu0 0.0
    %117 = vmatpush1.xpose.msra.mxu0 0.0
    %118 = vmatprep.subr.mxu0 0.0
    %119 = vmatpush1.xpose.msra.mxu0 0.0
    %120 = vmatprep.subr.mxu0 0.0
    %121 = vmatpush1.xpose.msra.mxu0 0.0
    %122 = vmatprep.subr.mxu0 0.0
    %123 = vmatpush1.xpose.msra.mxu0 0.0
    %124 = vmatprep.subr.mxu0 0.0
    %125 = vmatpush1.xpose.msra.mxu0 0.0
    %126 = vmatprep.subr.mxu0 0.0
    %127 = vmatpush1.xpose.msra.mxu0 0.0
    %128 = vmatprep.subr.mxu0 0.0
    %129 = vmatpush1.xpose.msra.mxu0 0.0
    %130 = vmatprep.mubr.f32.mxu0 %v42
    %131 = vmatmul.mubr.f32.gmra.mrb[0].mxu0 %v41
    %v132 = vpop.f32.mrb[0].mxu0
    %v133 = vadd.f32 %v64, %v132
    %v134 = vpop.f32.mrb[0].mxu0
    %135 = vdwg.mxu0
    %136 = vmatprep.subr.mxu0 %v50
    %137 = vmatpush1.xpose.msra.mxu0 %v49
    %138 = vmatprep.subr.mxu0 %v56
    %139 = vmatpush1.xpose.msra.mxu0 %v55
    %140 = vmatprep.subr.mxu0 0.0
    %141 = vmatpush1.xpose.msra.mxu0 0.0
    %142 = vmatprep.subr.mxu0 0.0
    %143 = vmatpush1.xpose.msra.mxu0 0.0
    %144 = vmatprep.subr.mxu0 0.0
    %145 = vmatpush1.xpose.msra.mxu0 0.0
    %146 = vmatprep.subr.mxu0 0.0
    %147 = vmatpush1.xpose.msra.mxu0 0.0
    %148 = vmatprep.subr.mxu0 0.0
    %149 = vmatpush1.xpose.msra.mxu0 0.0
    %150 = vmatprep.subr.mxu0 0.0
    %151 = vmatpush1.xpose.msra.mxu0 0.0
    %152 = vmatprep.subr.mxu0 0.0
    %153 = vmatpush1.xpose.msra.mxu0 0.0
    %154 = vmatprep.subr.mxu0 0.0
    %155 = vmatpush1.xpose.msra.mxu0 0.0
    %156 = vmatprep.subr.mxu0 0.0
    %157 = vmatpush1.xpose.msra.mxu0 0.0
    %158 = vmatprep.subr.mxu0 0.0
    %159 = vmatpush1.xpose.msra.mxu0 0.0
    %160 = vmatprep.subr.mxu0 0.0
    %161 = vmatpush1.xpose.msra.mxu0 0.0
    %162 = vmatprep.subr.mxu0 0.0
    %163 = vmatpush1.xpose.msra.mxu0 0.0
    %164 = vmatprep.subr.mxu0 0.0
    %165 = vmatpush1.xpose.msra.mxu0 0.0
    %166 = vmatprep.subr.mxu0 0.0
    %167 = vmatpush1.xpose.msra.mxu0 0.0
    %168 = vmatprep.subr.mxu0 0.0
    %169 = vmatpush1.xpose.msra.mxu0 0.0
    %170 = vmatprep.subr.mxu0 0.0
    %171 = vmatpush1.xpose.msra.mxu0 0.0
    %172 = vmatprep.subr.mxu0 0.0
    %173 = vmatpush1.xpose.msra.mxu0 0.0
    %174 = vmatprep.subr.mxu0 0.0
    %175 = vmatpush1.xpose.msra.mxu0 0.0
    %176 = vmatprep.subr.mxu0 0.0
    %177 = vmatpush1.xpose.msra.mxu0 0.0
    %178 = vmatprep.subr.mxu0 0.0
    %179 = vmatpush1.xpose.msra.mxu0 0.0
    %180 = vmatprep.subr.mxu0 0.0
    %181 = vmatpush1.xpose.msra.mxu0 0.0
    %182 = vmatprep.subr.mxu0 0.0
    %183 = vmatpush1.xpose.msra.mxu0 0.0
    %184 = vmatprep.subr.mxu0 0.0
    %185 = vmatpush1.xpose.msra.mxu0 0.0
    %186 = vmatprep.subr.mxu0 0.0
    %187 = vmatpush1.xpose.msra.mxu0 0.0
    %188 = vmatprep.subr.mxu0 0.0
    %189 = vmatpush1.xpose.msra.mxu0 0.0
    %190 = vmatprep.subr.mxu0 0.0
    %191 = vmatpush1.xpose.msra.mxu0 0.0
    %192 = vmatprep.subr.mxu0 0.0
    %193 = vmatpush1.xpose.msra.mxu0 0.0
    %194 = vmatprep.subr.mxu0 0.0
    %195 = vmatpush1.xpose.msra.mxu0 0.0
    %196 = vmatprep.subr.mxu0 0.0
    %197 = vmatpush1.xpose.msra.mxu0 0.0
    %198 = vmatprep.subr.mxu0 0.0
    %199 = vmatpush1.xpose.msra.mxu0 0.0
    %200 = vmatprep.mubr.f32.mxu0 %v44
    %201 = vmatmul.mubr.f32.gmra.mrb[0].mxu0 %v43
    %v202 = vpop.f32.mrb[0].mxu0
    %v203 = vadd.f32 %v133, %v202
    %v204 = vpop.f32.mrb[0].mxu0
    %205 = vdwg.mxu0
    %206 = vmatprep.subr.mxu0 %v52
    %207 = vmatpush1.xpose.msra.mxu0 %v51
    %208 = vmatprep.subr.mxu0 %v58
    %209 = vmatpush1.xpose.msra.mxu0 %v57
    %210 = vmatprep.subr.mxu0 0.0
    %211 = vmatpush1.xpose.msra.mxu0 0.0
    %212 = vmatprep.subr.mxu0 0.0
    %213 = vmatpush1.xpose.msra.mxu0 0.0
    %214 = vmatprep.subr.mxu0 0.0
    %215 = vmatpush1.xpose.msra.mxu0 0.0
    %216 = vmatprep.subr.mxu0 0.0
    %217 = vmatpush1.xpose.msra.mxu0 0.0
    %218 = vmatprep.subr.mxu0 0.0
    %219 = vmatpush1.xpose.msra.mxu0 0.0
    %220 = vmatprep.subr.mxu0 0.0
    %221 = vmatpush1.xpose.msra.mxu0 0.0
    %222 = vmatprep.subr.mxu0 0.0
    %223 = vmatpush1.xpose.msra.mxu0 0.0
    %224 = vmatprep.subr.mxu0 0.0
    %225 = vmatpush1.xpose.msra.mxu0 0.0
    %226 = vmatprep.subr.mxu0 0.0
    %227 = vmatpush1.xpose.msra.mxu0 0.0
    %228 = vmatprep.subr.mxu0 0.0
    %229 = vmatpush1.xpose.msra.mxu0 0.0
    %230 = vmatprep.subr.mxu0 0.0
    %231 = vmatpush1.xpose.msra.mxu0 0.0
    %232 = vmatprep.subr.mxu0 0.0
    %233 = vmatpush1.xpose.msra.mxu0 0.0
    %234 = vmatprep.subr.mxu0 0.0
    %235 = vmatpush1.xpose.msra.mxu0 0.0
    %236 = vmatprep.subr.mxu0 0.0
    %237 = vmatpush1.xpose.msra.mxu0 0.0
    %238 = vmatprep.subr.mxu0 0.0
    %239 = vmatpush1.xpose.msra.mxu0 0.0
    %240 = vmatprep.subr.mxu0 0.0
    %241 = vmatpush1.xpose.msra.mxu0 0.0
    %242 = vmatprep.subr.mxu0 0.0
    %243 = vmatpush1.xpose.msra.mxu0 0.0
    %244 = vmatprep.subr.mxu0 0.0
    %245 = vmatpush1.xpose.msra.mxu0 0.0
    %246 = vmatprep.subr.mxu0 0.0
    %247 = vmatpush1.xpose.msra.mxu0 0.0
    %248 = vmatprep.subr.mxu0 0.0
    %249 = vmatpush1.xpose.msra.mxu0 0.0
    %250 = vmatprep.subr.mxu0 0.0
    %251 = vmatpush1.xpose.msra.mxu0 0.0
    %252 = vmatprep.subr.mxu0 0.0
    %253 = vmatpush1.xpose.msra.mxu0 0.0
    %254 = vmatprep.subr.mxu0 0.0
    %255 = vmatpush1.xpose.msra.mxu0 0.0
    %256 = vmatprep.subr.mxu0 0.0
    %257 = vmatpush1.xpose.msra.mxu0 0.0
    %258 = vmatprep.subr.mxu0 0.0
    %259 = vmatpush1.xpose.msra.mxu0 0.0
    %260 = vmatprep.subr.mxu0 0.0
    %261 = vmatpush1.xpose.msra.mxu0 0.0
    %262 = vmatprep.subr.mxu0 0.0
    %263 = vmatpush1.xpose.msra.mxu0 0.0
    %264 = vmatprep.subr.mxu0 0.0
    %265 = vmatpush1.xpose.msra.mxu0 0.0
    %266 = vmatprep.subr.mxu0 0.0
    %267 = vmatpush1.xpose.msra.mxu0 0.0
    %268 = vmatprep.subr.mxu0 0.0
    %269 = vmatpush1.xpose.msra.mxu0 0.0
    %270 = vmatprep.mubr.f32.mxu0 %v46
    %271 = vmatmul.mubr.f32.gmra.mrb[0].mxu0 %v45
    %v272 = vpop.f32.mrb[0].mxu0
    %v273 = vadd.f32 %v203, %v272
    %v274 = vpop.f32.mrb[0].mxu0
    %275 = vdwg.mxu0
    %vm276 = vcmask 130048
    %277 = vst.msk [vmem:[#allocation7] sm:$0xff] %vm276, %v273
    // Predicated region
    $region22: #{tpu_custom_call.1} parent=1 // pred_check
      _
    $region23: #{tpu_custom_call.1} parent=1 // pred_check_branch
      %279 = sbr.rel (0) target = $region25
    $region24: #{tpu_custom_call.1} parent=1 // pred_region
      %s281 = ssub.s32 128, 128
      %282 = vsyncadd [#allocation4], %s281
      %s284 = sshll.u32 [#allocation7], 4
      %s285 = int_to_ptr.vmem [resolvable:$true] %s284
      %287 = dma.vmem_to_hbm [thread:$0]  %s285, 128, %s3, [#allocation4]
    $region25: #{tpu_custom_call.1} parent=1 // pred_fallthru
      _
    // Predicated region
    $region26: #{tpu_custom_call.1} parent=1 // pred_check
      _
    $region27: #{tpu_custom_call.1} parent=1 // pred_check_branch
      %289 = sbr.rel (0) target = $region29
    $region28: #{tpu_custom_call.1} parent=1 // pred_region
      %290 = dma.done [#allocation4], 128
    $region29: #{tpu_custom_call.1} parent=1 // pred_fallthru
      _
    %291 = vsyncpa [#allocation3], 1
    %292 = vsyncpa [#allocation6], 1
    %293 = vsyncpa [#allocation4], 1

</llo_original>
